<compile_context>
chip_gen: v7x
topology: tpu7x:2x2x1
jax: 0.10.0
libtpu: 0.0.40
codegen_flags: <defaults>
</compile_context>

<pallas_src>
import functools

import jax
import jax.numpy as jnp
from jax.experimental import pallas as pl
from jax.experimental.pallas import tpu as pltpu

_LANE = 128          # vreg lane width / MXU tile width
_SUBLANE_BF16 = 16   # bf16 sublane packing; node dim padded to this


def _round_up(x, m):
    return (x + m - 1) // m * m


def _full_spec(shape):
    # Single full-array block (no grid); everything fits comfortably in VMEM.
    return pl.BlockSpec(shape, lambda: (0,) * len(shape))


# ----------------------------- fused Pallas kernel ----------------------------- #

def _gcn_fused_kernel(x_ref, adj_ref, wg_ref, bg_ref, wo_ref, bo_ref,
                      logp_ref, emb_ref, *, num_layers):
    """Whole GCN forward in one kernel invocation.

    x_ref   : (Np, P)   f32  zero-padded input features
    adj_ref : (Np, Np)  bf16 zero-padded dense adjacency (loaded once)
    wg_ref  : (L, P, P) bf16 stacked, zero-padded GraphConvolution weights
    bg_ref  : (L, 1, P) f32  stacked, zero-padded GraphConvolution biases
    wo_ref  : (P, Cp)   bf16 zero-padded head weight
    bo_ref  : (1, Cp)   f32  head bias; padded class entries are -1e30 (mask)
    logp_ref: (Np, Cp)  f32  log_softmax output (padded cols sliced off outside)
    emb_ref : (Np, P)   f32  final node embeddings (padded cols are exactly 0)
    """
    adj = adj_ref[...]           # bf16, DMA'd HBM->VMEM exactly once, reused per layer
    y = x_ref[...]               # f32 running activation, carried as a traced value

    for l in range(num_layers):  # static, unrolled layer loop
        # support = y @ W_l : (Np, P) x (P, P) -> (Np, P), bf16 operands, f32 acc
        support = jnp.dot(y.astype(jnp.bfloat16), wg_ref[l],
                          preferred_element_type=jnp.float32)
        # agg = adj @ support : (Np, Np) x (Np, P) -> (Np, P), bf16 operands, f32 acc
        agg = jnp.dot(adj, support.astype(jnp.bfloat16),
                      preferred_element_type=jnp.float32)
        # bias add + tanh in f32 (VPU/EUP); padded columns stay exactly zero.
        y = jnp.tanh(agg + bg_ref[l])

    emb_ref[...] = y

    # ---- Linear head + numerically stable log_softmax (dim=1) ----
    # Padded classes: wo pad columns are 0 and bo pad entries are -1e30, so the
    # padded logits are ~-1e30 and vanish from the max/sum with no extra mask.
    logits = jnp.dot(y.astype(jnp.bfloat16), wo_ref[...],
                     preferred_element_type=jnp.float32) + bo_ref[...]
    m = jnp.max(logits, axis=1, keepdims=True)
    shifted = logits - m
    lse = jnp.log(jnp.sum(jnp.exp(shifted), axis=1, keepdims=True))
    logp_ref[...] = shifted - lse


# --------------------------------- JAX wrappers --------------------------------- #

def init_gcn_params(key, input_dim, num_hid_layers, hidden_dim, num_class):
    """Deterministic parameter init matching the PyTorch module's shapes (f32)."""
    dims = [(input_dim, hidden_dim)] + [(hidden_dim, hidden_dim)] * num_hid_layers
    params = {"gcn": [], "out": None}
    for (din, dout) in dims:
        key, kw, kb = jax.random.split(key, 3)
        bound = 1.0 / jnp.sqrt(dout)
        w = jax.random.uniform(kw, (din, dout), jnp.float32, -bound, bound)
        b = jax.random.uniform(kb, (1, dout), jnp.float32, -bound, bound)
        params["gcn"].append((w, b))
    key, kw, kb = jax.random.split(key, 3)
    bound = 1.0 / jnp.sqrt(hidden_dim)
    w_out = jax.random.uniform(kw, (hidden_dim, num_class), jnp.float32, -bound, bound)
    b_out = jax.random.uniform(kb, (1, num_class), jnp.float32, -bound, bound)
    params["out"] = (w_out, b_out)
    return params


def pack_gcn_params(params, input_dim, hidden_dim, num_class):
    """Zero-pad + stack parameters into lane-dense slabs; bf16 matmul operands."""
    p = _round_up(max(input_dim, hidden_dim), _LANE)
    cp = _round_up(num_class, _LANE)
    wg, bg = [], []
    for (w, b) in params["gcn"]:
        wg.append(jnp.zeros((p, p), jnp.float32).at[:w.shape[0], :w.shape[1]].set(w))
        bg.append(jnp.zeros((1, p), jnp.float32).at[:, :b.shape[1]].set(b))
    w_out, b_out = params["out"]
    wo = jnp.zeros((p, cp), jnp.float32).at[:w_out.shape[0], :w_out.shape[1]].set(w_out)
    # Padded-class mask baked into the bias: wo pad cols are 0 => logit = -1e30.
    bo = jnp.full((1, cp), -1e30, jnp.float32).at[:, :b_out.shape[1]].set(b_out)
    return {"wg": jnp.stack(wg).astype(jnp.bfloat16),   # (L, P, P)  bf16
            "bg": jnp.stack(bg),                        # (L, 1, P)  f32
            "wo": wo.astype(jnp.bfloat16),              # (P, Cp)    bf16
            "bo": bo}                                   # (1, Cp)    f32


@functools.partial(jax.jit, static_argnames=("num_class", "hidden_dim"))
def gcn_forward(packed, x, adj_w, *, num_class, hidden_dim):
    n, f = x.shape
    num_layers, p, _ = packed["wg"].shape
    cp = packed["wo"].shape[1]
    # Node dim padded only to the bf16 sublane tile (16), NOT 128: avoids the
    # quadratic zero-work blowup on the adjacency matmul at small N. The
    # lane/contraction dims (p, cp) stay multiples of 128.
    n_pad = _round_up(max(n, _SUBLANE_BF16), _SUBLANE_BF16)

    # Layout plumbing only (zero-padding + dtype packing); math is in the kernel.
    x_p = jnp.zeros((n_pad, p), jnp.float32).at[:n, :f].set(x.astype(jnp.float32))
    adj_p = jnp.zeros((n_pad, n_pad), jnp.bfloat16).at[:n, :n].set(
        adj_w.astype(jnp.bfloat16))

    kernel = functools.partial(_gcn_fused_kernel, num_layers=int(num_layers))

    L = int(num_layers)
    flops = 2 * L * (n_pad * p * p + n_pad * n_pad * p) + 2 * n_pad * p * cp
    transcendentals = L * n_pad * p + n_pad * cp
    resident_bytes = (x_p.size * 4 + adj_p.size * 2
                      + packed["wg"].size * 2 + packed["bg"].size * 4
                      + packed["wo"].size * 2 + packed["bo"].size * 4
                      + n_pad * cp * 4 + n_pad * p * 4)
    # Scoped VMEM sized to the true resident footprint (with headroom), capped
    # at v7x's 64 MiB physical VMEM per TensorCore.
    vmem_limit = int(min(max(2 * resident_bytes + (4 << 20), 16 << 20), 64 << 20))

    logp_p, emb_p = pl.pallas_call(
        kernel,
        out_shape=(jax.ShapeDtypeStruct((n_pad, cp), jnp.float32),
                   jax.ShapeDtypeStruct((n_pad, p), jnp.float32)),
        in_specs=[_full_spec((n_pad, p)),
                  _full_spec((n_pad, n_pad)),
                  _full_spec(packed["wg"].shape),
                  _full_spec(packed["bg"].shape),
                  _full_spec(packed["wo"].shape),
                  _full_spec(packed["bo"].shape)],
        out_specs=(_full_spec((n_pad, cp)), _full_spec((n_pad, p))),
        compiler_params=pltpu.CompilerParams(vmem_limit_bytes=vmem_limit),
        cost_estimate=pl.CostEstimate(flops=flops,
                                      transcendentals=transcendentals,
                                      bytes_accessed=resident_bytes),
    )(x_p, adj_p, packed["wg"], packed["bg"], packed["wo"], packed["bo"])

    # Slice the zero-padding back off.
    return logp_p[:n, :num_class], emb_p[:n, :hidden_dim]


def _ref_forward(params, x, adj_w):
    """Pure-JAX f32 reference of the PyTorch module (correctness check)."""
    y = x
    for (w, b) in params["gcn"]:
        y = jnp.tanh(adj_w @ (y @ w) + b)
    w_out, b_out = params["out"]
    logits = y @ w_out + b_out
    return jax.nn.log_softmax(logits, axis=1), y


# ------------------------------------- main ------------------------------------- #

if __name__ == "__main__":
    # Small GCN: 16 nodes, 8 input features, 1 hidden layer (=> 2 GraphConv
    # layers), hidden_dim=32, 4 classes. Dropout is unused in the reference
    # forward, so it is not applied here either.
    N, INPUT_DIM, NUM_HID_LAYERS, HIDDEN_DIM, NUM_CLASS = 16, 8, 1, 32, 4

    key = jax.random.PRNGKey(0)
    key, kx, ka = jax.random.split(key, 3)
    x = jax.random.normal(kx, (N, INPUT_DIM), jnp.float32)
    # symmetric, row-normalized dense adjacency with self loops
    a = jax.random.uniform(ka, (N, N), jnp.float32)
    a = (a + a.T) * 0.5 + jnp.eye(N, dtype=jnp.float32)
    adj_w = a / jnp.sum(a, axis=1, keepdims=True)

    params = init_gcn_params(key, INPUT_DIM, NUM_HID_LAYERS, HIDDEN_DIM, NUM_CLASS)
    packed = pack_gcn_params(params, INPUT_DIM, HIDDEN_DIM, NUM_CLASS)

    log_probs, node_embeddings = gcn_forward(
        packed, x, adj_w, num_class=NUM_CLASS, hidden_dim=HIDDEN_DIM)
    jax.block_until_ready((log_probs, node_embeddings))

    assert log_probs.shape == (N, NUM_CLASS)
    assert node_embeddings.shape == (N, HIDDEN_DIM)
    # log_softmax rows must sum (in prob space) to 1
    assert bool(jnp.allclose(jnp.sum(jnp.exp(log_probs), axis=1), 1.0, atol=1e-4))

    # Cross-check against the pure-JAX f32 reference (bf16 matmul operands, f32
    # accumulation => expect agreement well inside a few 1e-2).
    ref_lp, ref_emb = _ref_forward(params, x, adj_w)
    assert bool(jnp.allclose(log_probs, ref_lp, atol=5e-2, rtol=5e-2))
    assert bool(jnp.allclose(node_embeddings, ref_emb, atol=5e-2, rtol=5e-2))

    print("KERNEL_OK")
</pallas_src>

<mosaic_0001>
module attributes {stable_mosaic.version = 11 : i64} {
  func.func @_gcn_fused_kernel(%arg0: memref<16x128xf32, #tpu.memory_space<vmem>>, %arg1: memref<16x16xbf16, #tpu.memory_space<vmem>>, %arg2: memref<2x128x128xbf16, #tpu.memory_space<vmem>>, %arg3: memref<2x1x128xf32, #tpu.memory_space<vmem>>, %arg4: memref<128x128xbf16, #tpu.memory_space<vmem>>, %arg5: memref<1x128xf32, #tpu.memory_space<vmem>>, %arg6: memref<16x128xf32, #tpu.memory_space<vmem>>, %arg7: memref<16x128xf32, #tpu.memory_space<vmem>>) attributes {dimension_semantics = [], scalar_prefetch = 0 : i64, scratch_operands = 0 : i64, tpu.core_type = #tpu.core_type<tc>} {
    %c0 = arith.constant 0 : index
    %c0_0 = arith.constant 0 : index
    %0 = vector.load %arg1[%c0, %c0_0] : memref<16x16xbf16, #tpu.memory_space<vmem>>, vector<16x16xbf16>
    %c0_1 = arith.constant 0 : index
    %c0_2 = arith.constant 0 : index
    %1 = vector.load %arg0[%c0_1, %c0_2] : memref<16x128xf32, #tpu.memory_space<vmem>>, vector<16x128xf32>
    %2 = arith.truncf %1 : vector<16x128xf32> to vector<16x128xbf16>
    %c0_3 = arith.constant 0 : index
    %c0_4 = arith.constant 0 : index
    %c0_5 = arith.constant 0 : index
    %3 = vector.load %arg2[%c0_3, %c0_4, %c0_5] : memref<2x128x128xbf16, #tpu.memory_space<vmem>>, vector<1x128x128xbf16>
    %4 = vector.shape_cast %3 : vector<1x128x128xbf16> to vector<128x128xbf16>
    %cst = arith.constant dense<0.000000e+00> : vector<16x128xf32>
    %5 = tpu.matmul %2, %4, %cst {dimension_numbers = #tpu.dot_dimension_numbers<[1], [0], [0], [1], [0, 0, 1, 1], [], []>} : vector<16x128xbf16>, vector<128x128xbf16>, vector<16x128xf32> -> vector<16x128xf32>
    %6 = arith.truncf %5 : vector<16x128xf32> to vector<16x128xbf16>
    %cst_6 = arith.constant dense<0.000000e+00> : vector<16x128xf32>
    %7 = tpu.matmul %0, %6, %cst_6 {dimension_numbers = #tpu.dot_dimension_numbers<[1], [0], [0], [1], [0, 0, 1, 1], [], []>} : vector<16x16xbf16>, vector<16x128xbf16>, vector<16x128xf32> -> vector<16x128xf32>
    %c0_7 = arith.constant 0 : index
    %c0_8 = arith.constant 0 : index
    %c0_9 = arith.constant 0 : index
    %8 = vector.load %arg3[%c0_7, %c0_8, %c0_9] : memref<2x1x128xf32, #tpu.memory_space<vmem>>, vector<1x1x128xf32>
    %9 = vector.shape_cast %8 : vector<1x1x128xf32> to vector<1x128xf32>
    %10 = vector.broadcast %9 : vector<1x128xf32> to vector<16x128xf32>
    %11 = arith.addf %7, %10 : vector<16x128xf32>
    %12 = math.tanh %11 : vector<16x128xf32>
    %13 = arith.truncf %12 : vector<16x128xf32> to vector<16x128xbf16>
    %c1 = arith.constant 1 : index
    %c0_10 = arith.constant 0 : index
    %c0_11 = arith.constant 0 : index
    %14 = vector.load %arg2[%c1, %c0_10, %c0_11] : memref<2x128x128xbf16, #tpu.memory_space<vmem>>, vector<1x128x128xbf16>
    %15 = vector.shape_cast %14 : vector<1x128x128xbf16> to vector<128x128xbf16>
    %cst_12 = arith.constant dense<0.000000e+00> : vector<16x128xf32>
    %16 = tpu.matmul %13, %15, %cst_12 {dimension_numbers = #tpu.dot_dimension_numbers<[1], [0], [0], [1], [0, 0, 1, 1], [], []>} : vector<16x128xbf16>, vector<128x128xbf16>, vector<16x128xf32> -> vector<16x128xf32>
    %17 = arith.truncf %16 : vector<16x128xf32> to vector<16x128xbf16>
    %cst_13 = arith.constant dense<0.000000e+00> : vector<16x128xf32>
    %18 = tpu.matmul %0, %17, %cst_13 {dimension_numbers = #tpu.dot_dimension_numbers<[1], [0], [0], [1], [0, 0, 1, 1], [], []>} : vector<16x16xbf16>, vector<16x128xbf16>, vector<16x128xf32> -> vector<16x128xf32>
    %c1_14 = arith.constant 1 : index
    %c0_15 = arith.constant 0 : index
    %c0_16 = arith.constant 0 : index
    %19 = vector.load %arg3[%c1_14, %c0_15, %c0_16] : memref<2x1x128xf32, #tpu.memory_space<vmem>>, vector<1x1x128xf32>
    %20 = vector.shape_cast %19 : vector<1x1x128xf32> to vector<1x128xf32>
    %21 = vector.broadcast %20 : vector<1x128xf32> to vector<16x128xf32>
    %22 = arith.addf %18, %21 : vector<16x128xf32>
    %23 = math.tanh %22 : vector<16x128xf32>
    %c0_17 = arith.constant 0 : index
    %c0_18 = arith.constant 0 : index
    %24 = vector.load %arg7[%c0_17, %c0_18] : memref<16x128xf32, #tpu.memory_space<vmem>>, vector<16x128xf32>
    tpu.vector_store %arg7[%c0_17, %c0_18], %23 {strides = array<i32>} : memref<16x128xf32, #tpu.memory_space<vmem>>, vector<16x128xf32>,
    %25 = arith.truncf %23 : vector<16x128xf32> to vector<16x128xbf16>
    %c0_19 = arith.constant 0 : index
    %c0_20 = arith.constant 0 : index
    %26 = vector.load %arg4[%c0_19, %c0_20] : memref<128x128xbf16, #tpu.memory_space<vmem>>, vector<128x128xbf16>
    %cst_21 = arith.constant dense<0.000000e+00> : vector<16x128xf32>
    %27 = tpu.matmul %25, %26, %cst_21 {dimension_numbers = #tpu.dot_dimension_numbers<[1], [0], [0], [1], [0, 0, 1, 1], [], []>} : vector<16x128xbf16>, vector<128x128xbf16>, vector<16x128xf32> -> vector<16x128xf32>
    %c0_22 = arith.constant 0 : index
    %c0_23 = arith.constant 0 : index
    %28 = vector.load %arg5[%c0_22, %c0_23] : memref<1x128xf32, #tpu.memory_space<vmem>>, vector<1x128xf32>
    %29 = vector.broadcast %28 : vector<1x128xf32> to vector<16x128xf32>
    %30 = arith.addf %27, %29 : vector<16x128xf32>
    %cst_24 = arith.constant dense<0xFF800000> : vector<16xf32>
    %31 = vector.multi_reduction <maximumf>, %30, %cst_24 [1] : vector<16x128xf32> to vector<16xf32>
    %32 = vector.shape_cast %31 : vector<16xf32> to vector<16x1xf32>
    %33 = vector.broadcast %32 : vector<16x1xf32> to vector<16x128xf32>
    %34 = arith.subf %30, %33 : vector<16x128xf32>
    %35 = math.exp %34 : vector<16x128xf32>
    %cst_25 = arith.constant dense<0.000000e+00> : vector<16xf32>
    %36 = vector.multi_reduction <add>, %35, %cst_25 [1] : vector<16x128xf32> to vector<16xf32>
    %37 = vector.shape_cast %36 : vector<16xf32> to vector<16x1xf32>
    %38 = math.log %37 : vector<16x1xf32>
    %39 = vector.broadcast %38 : vector<16x1xf32> to vector<16x128xf32>
    %40 = arith.subf %34, %39 : vector<16x128xf32>
    %c0_26 = arith.constant 0 : index
    %c0_27 = arith.constant 0 : index
    %41 = vector.load %arg6[%c0_26, %c0_27] : memref<16x128xf32, #tpu.memory_space<vmem>>, vector<16x128xf32>
    tpu.vector_store %arg6[%c0_26, %c0_27], %40 {strides = array<i32>} : memref<16x128xf32, #tpu.memory_space<vmem>>, vector<16x128xf32>,
    return
  }
}

</mosaic_0001>

<llo_original>
// kernel: gcn_forward.1
$region0: #{gcn_forward.1}
  #allocation0 [shape = 'u32[]', space=smem, size = 0x4, offset = 0x4, fixed_abs, tag = 'smem constant byte address 0x4 - core index']
  #allocation1 [shape = 'u32[144,128]{1,0:T(1,128)}', space=vmem, size = 0x12000, scoped, tag = 'internal scratch']
  %s0 = inlined_call_operand.vmem [shape: f32[16,128], index: 0, kind: input, shape index: {}]
  %s1 = inlined_call_operand.vmem [shape: bf16[16,16], index: 1, kind: input, shape index: {}]
  %s2 = inlined_call_operand.hbm [shape: bf16[2,128,128], index: 2, kind: input, shape index: {}]
  %s3 = inlined_call_operand.vmem [shape: f32[2,1,128], index: 3, kind: input, shape index: {}]
  %s4 = inlined_call_operand.vmem [shape: bf16[128,128], index: 4, kind: input, shape index: {}]
  %s5 = inlined_call_operand.vmem [shape: f32[1,128], index: 5, kind: input, shape index: {}]
  %s6 = inlined_call_operand.vmem [shape: f32[16,128], index: 6, kind: output, shape index: {0}]
  %s7 = inlined_call_operand.hbm [shape: f32[16,128], index: 7, kind: output, shape index: {1}]
  %8 = xla_tuple %s6, %s7
  %s9 = sld [smem:[#allocation0]]
  $region46: #{gcn_forward.1} parent=0
    _
  %s11 = ssub.s32 1, %s9
  %s12 = scalar_select 0, %s11, %s9
  $region1: #{gcn_forward.1} parent=0
    #allocation2 [shape = 'u8[65536]{0}', space=vmem, size = 0x10000, scoped, tag = 'input window, operand 2, single buffered']
    #allocation3 [shape = 's32[1]{0}', space=sflag, size = 0x4, scoped, tag = 'scoped memory for gcn_forward.1']
    #allocation4 [shape = 's32[1]{0}', space=sflag, size = 0x4, scoped, tag = 'scoped memory for gcn_forward.1']
    #allocation5 [shape = 'u8[8192]{0}', space=vmem, size = 0x2000, scoped, tag = 'output window, operand 1, single buffered']
    %13 = vsyncpa [#allocation3], 0
    %14 = vsyncpa [#allocation4], 0
    // Predicated region
    $region2: #{gcn_forward.1} parent=1 // pred_check
      _
    $region3: #{gcn_forward.1} parent=1 // pred_check_branch
      %16 = sbr.rel (0) target = $region5
    $region4: #{gcn_forward.1} parent=1 // pred_region
      _
    $region5: #{gcn_forward.1} parent=1 // pred_fallthru
      _
    // Predicated region
    $region6: #{gcn_forward.1} parent=1 // pred_check
      _
    $region7: #{gcn_forward.1} parent=1 // pred_check_branch
      %18 = sbr.rel (0) target = $region9
    $region8: #{gcn_forward.1} parent=1 // pred_region
      _
    $region9: #{gcn_forward.1} parent=1 // pred_fallthru
      _
    // Predicated region
    $region10: #{gcn_forward.1} parent=1 // pred_check
      _
    $region11: #{gcn_forward.1} parent=1 // pred_check_branch
      %20 = sbr.rel (0) target = $region13
    $region12: #{gcn_forward.1} parent=1 // pred_region
      %s22 = ssub.s32 2048, 2048
      %23 = vsyncadd [#allocation3], %s22
      %s24 = sshll.u32 [#allocation2], 4
      %s25 = int_to_ptr.vmem [resolvable:$true] %s24
      %30 = dma.hbm_to_vmem [thread:$0]  %s2, 2048, %s25, [#allocation3], 64, 64, 4
    $region13: #{gcn_forward.1} parent=1 // pred_fallthru
      _
    // Predicated region
    $region14: #{gcn_forward.1} parent=1 // pred_check
      _
    $region15: #{gcn_forward.1} parent=1 // pred_check_branch
      %32 = sbr.rel (0) target = $region17
    $region16: #{gcn_forward.1} parent=1 // pred_region
      _
    $region17: #{gcn_forward.1} parent=1 // pred_fallthru
      _
    // Predicated region
    $region18: #{gcn_forward.1} parent=1 // pred_check
      _
    $region19: #{gcn_forward.1} parent=1 // pred_check_branch
      %34 = sbr.rel (0) target = $region21
    $region20: #{gcn_forward.1} parent=1 // pred_region
      _
    $region21: #{gcn_forward.1} parent=1 // pred_fallthru
      _
    // Predicated region
    $region22: #{gcn_forward.1} parent=1 // pred_check
      _
    $region23: #{gcn_forward.1} parent=1 // pred_check_branch
      %36 = sbr.rel (0) target = $region25
    $region24: #{gcn_forward.1} parent=1 // pred_region
      _
    $region25: #{gcn_forward.1} parent=1 // pred_fallthru
      _
    // Predicated region
    $region26: #{gcn_forward.1} parent=1 // pred_check
      _
    $region27: #{gcn_forward.1} parent=1 // pred_check_branch
      %38 = sbr.rel (0) target = $region29
    $region28: #{gcn_forward.1} parent=1 // pred_region
      %39 = dma.done [#allocation3], 2048
    $region29: #{gcn_forward.1} parent=1 // pred_fallthru
      _
    %v41 = vld [vmem:[%s1] sm:$0xf]
    %v42 = vld [vmem:[%s1 + $0x4] sm:$0xf]
    %v43 = vld [vmem:[%s0] sm:$0xff]
    %v44 = vld [vmem:[%s0 + $0x8] sm:$0xff]
    %v45 = vpack.c.bf16 %v44, %v43
    %v46 = vld [vmem:[#allocation2] sm:$0xf]
    %v47 = vld [vmem:[#allocation2 + $0x4] sm:$0xf]
    %v48 = vld [vmem:[#allocation2 + $0x8] sm:$0xf]
    %v49 = vld [vmem:[#allocation2 + $0xc] sm:$0xf]
    %v50 = vld [vmem:[#allocation2 + $0x10] sm:$0xf]
    %v51 = vld [vmem:[#allocation2 + $0x14] sm:$0xf]
    %v52 = vld [vmem:[#allocation2 + $0x18] sm:$0xf]
    %v53 = vld [vmem:[#allocation2 + $0x1c] sm:$0xf]
    %v54 = vld [vmem:[#allocation2 + $0x20] sm:$0xf]
    %v55 = vld [vmem:[#allocation2 + $0x24] sm:$0xf]
    %v56 = vld [vmem:[#allocation2 + $0x28] sm:$0xf]
    %v57 = vld [vmem:[#allocation2 + $0x2c] sm:$0xf]
    %v58 = vld [vmem:[#allocation2 + $0x30] sm:$0xf]
    %v59 = vld [vmem:[#allocation2 + $0x34] sm:$0xf]
    %v60 = vld [vmem:[#allocation2 + $0x38] sm:$0xf]
    %v61 = vld [vmem:[#allocation2 + $0x3c] sm:$0xf]
    %v78 = vunpack.c.l.b16 %v46
    %v79 = vunpack.c.l.b16 %v47
    %v80 = vunpack.c.l.b16 %v48
    %v81 = vunpack.c.l.b16 %v49
    %v82 = vunpack.c.l.b16 %v50
    %v83 = vunpack.c.l.b16 %v51
    %v84 = vunpack.c.l.b16 %v52
    %v85 = vunpack.c.l.b16 %v53
    %v86 = vunpack.c.l.b16 %v54
    %v87 = vunpack.c.l.b16 %v55
    %v88 = vunpack.c.l.b16 %v56
    %v89 = vunpack.c.l.b16 %v57
    %v90 = vunpack.c.l.b16 %v58
    %v91 = vunpack.c.l.b16 %v59
    %v92 = vunpack.c.l.b16 %v60
    %v93 = vunpack.c.l.b16 %v61
    %v94 = vpack.c.b16 %v79, %v78
    %v95 = vpack.c.b16 %v81, %v80
    %v96 = vpack.c.b16 %v83, %v82
    %v97 = vpack.c.b16 %v85, %v84
    %v98 = vpack.c.b16 %v87, %v86
    %v99 = vpack.c.b16 %v89, %v88
    %v100 = vpack.c.b16 %v91, %v90
    %v101 = vpack.c.b16 %v93, %v92
    %110 = vmatprep.subr.bf16.mxu0 0
    %111 = vmatpush1.bf16.msra.mxu0 %v94
    %112 = vmatprep.subr.bf16.mxu0 0
    %113 = vmatpush1.bf16.msra.mxu0 %v95
    %114 = vmatprep.subr.bf16.mxu0 0
    %115 = vmatpush1.bf16.msra.mxu0 %v96
    %116 = vmatprep.subr.bf16.mxu0 0
    %117 = vmatpush1.bf16.msra.mxu0 %v97
    %118 = vmatprep.subr.bf16.mxu0 0
    %119 = vmatpush1.bf16.msra.mxu0 %v98
    %120 = vmatprep.subr.bf16.mxu0 0
    %121 = vmatpush1.bf16.msra.mxu0 %v99
    %122 = vmatprep.subr.bf16.mxu0 0
    %123 = vmatpush1.bf16.msra.mxu0 %v100
    %124 = vmatprep.subr.bf16.mxu0 0
    %125 = vmatpush1.bf16.msra.mxu0 %v101
    %126 = vmatprep.subr.bf16.mxu0 0
    %127 = vmatpush1.bf16.msra.mxu0 0
    %128 = vmatprep.subr.bf16.mxu0 0
    %129 = vmatpush1.bf16.msra.mxu0 0
    %130 = vmatprep.subr.bf16.mxu0 0
    %131 = vmatpush1.bf16.msra.mxu0 0
    %132 = vmatprep.subr.bf16.mxu0 0
    %133 = vmatpush1.bf16.msra.mxu0 0
    %134 = vmatprep.subr.bf16.mxu0 0
    %135 = vmatpush1.bf16.msra.mxu0 0
    %136 = vmatprep.subr.bf16.mxu0 0
    %137 = vmatpush1.bf16.msra.mxu0 0
    %138 = vmatprep.subr.bf16.mxu0 0
    %139 = vmatpush1.bf16.msra.mxu0 0
    %140 = vmatprep.subr.bf16.mxu0 0
    %141 = vmatpush1.bf16.msra.mxu0 0
    %142 = vmatprep.mubr.bf16.mxu0 0
    %143 = vmatmul.mubr.bf16.gmra.mrb[0].mxu0 %v45
    %v144 = vpop.f32.mrb[0].mxu0
    %v145 = vadd.f32 0.0, %v144
    %v146 = vpop.f32.mrb[0].mxu0
    %v147 = vpop.f32.mrb[0].mxu0
    %v148 = vadd.f32 0.0, %v147
    %v149 = vpop.f32.mrb[0].mxu0
    %150 = vdwg.mxu0
    %v151 = vpack.c.bf16 %v148, %v145
    %v152 = vld [vmem:[%s3] sm:$0x1]
    %v154 = vlaneseq
    %v155 = vshrl.u32 %v154, 7
    %v156 = vsub.s32 0, %v155
    %v157 = vrot.slane %v152, %v156
    %v161 = vunpack.c.l.b16 %v41
    %v162 = vunpack.c.l.b16 %v42
    %v163 = vpack.c.b16 %v162, %v161
    %vm164 = vcmask 130048
    %v166 = vsel %vm164, %v163, 0
    %168 = vmatprep.subr.bf16.mxu0 0
    %169 = vmatpush1.bf16.msra.mxu0 %v151
    %170 = vmatprep.subr.bf16.mxu0 0
    %171 = vmatpush1.bf16.msra.mxu0 0
    %172 = vmatprep.subr.bf16.mxu0 0
    %173 = vmatpush1.bf16.msra.mxu0 0
    %174 = vmatprep.subr.bf16.mxu0 0
    %175 = vmatpush1.bf16.msra.mxu0 0
    %176 = vmatprep.subr.bf16.mxu0 0
    %177 = vmatpush1.bf16.msra.mxu0 0
    %178 = vmatprep.subr.bf16.mxu0 0
    %179 = vmatpush1.bf16.msra.mxu0 0
    %180 = vmatprep.subr.bf16.mxu0 0
    %181 = vmatpush1.bf16.msra.mxu0 0
    %182 = vmatprep.subr.bf16.mxu0 0
    %183 = vmatpush1.bf16.msra.mxu0 0
    %184 = vmatprep.subr.bf16.mxu0 0
    %185 = vmatpush1.bf16.msra.mxu0 0
    %186 = vmatprep.subr.bf16.mxu0 0
    %187 = vmatpush1.bf16.msra.mxu0 0
    %188 = vmatprep.subr.bf16.mxu0 0
    %189 = vmatpush1.bf16.msra.mxu0 0
    %190 = vmatprep.subr.bf16.mxu0 0
    %191 = vmatpush1.bf16.msra.mxu0 0
    %192 = vmatprep.subr.bf16.mxu0 0
    %193 = vmatpush1.bf16.msra.mxu0 0
    %194 = vmatprep.subr.bf16.mxu0 0
    %195 = vmatpush1.bf16.msra.mxu0 0
    %196 = vmatprep.subr.bf16.mxu0 0
    %197 = vmatpush1.bf16.msra.mxu0 0
    %198 = vmatprep.subr.bf16.mxu0 0
    %199 = vmatpush1.bf16.msra.mxu0 0
    %200 = vmatprep.mubr.bf16.mxu0 0
    %201 = vmatmul.mubr.bf16.gmra.mrb[0].mxu0 %v166
    %v202 = vpop.f32.mrb[0].mxu0
    %v203 = vadd.f32 %v157, %v202
    %v204 = vpop.f32.mrb[0].mxu0
    %v205 = vpop.f32.mrb[0].mxu0
    %v206 = vadd.f32 %v157, %v205
    %v207 = vpop.f32.mrb[0].mxu0
    %208 = vdwg.mxu0
    %v209 = vtanh.pop %v203
    %v210 = vtanh.pop %v206
    %v211 = vpack.c.bf16 %v210, %v209
    %s212 = scalar_lea.vmem [#allocation2], 64
    %v213 = vld [vmem:[%s212] sm:$0xf]
    %v214 = vld [vmem:[%s212 + $0x4] sm:$0xf]
    %v215 = vld [vmem:[%s212 + $0x8] sm:$0xf]
    %v216 = vld [vmem:[%s212 + $0xc] sm:$0xf]
    %v217 = vld [vmem:[%s212 + $0x10] sm:$0xf]
    %v218 = vld [vmem:[%s212 + $0x14] sm:$0xf]
    %v219 = vld [vmem:[%s212 + $0x18] sm:$0xf]
    %v220 = vld [vmem:[%s212 + $0x1c] sm:$0xf]
    %v221 = vld [vmem:[%s212 + $0x20] sm:$0xf]
    %v222 = vld [vmem:[%s212 + $0x24] sm:$0xf]
    %v223 = vld [vmem:[%s212 + $0x28] sm:$0xf]
    %v224 = vld [vmem:[%s212 + $0x2c] sm:$0xf]
    %v225 = vld [vmem:[%s212 + $0x30] sm:$0xf]
    %v226 = vld [vmem:[%s212 + $0x34] sm:$0xf]
    %v227 = vld [vmem:[%s212 + $0x38] sm:$0xf]
    %v228 = vld [vmem:[%s212 + $0x3c] sm:$0xf]
    %v245 = vunpack.c.l.b16 %v213
    %v246 = vunpack.c.l.b16 %v214
    %v247 = vunpack.c.l.b16 %v215
    %v248 = vunpack.c.l.b16 %v216
    %v249 = vunpack.c.l.b16 %v217
    %v250 = vunpack.c.l.b16 %v218
    %v251 = vunpack.c.l.b16 %v219
    %v252 = vunpack.c.l.b16 %v220
    %v253 = vunpack.c.l.b16 %v221
    %v254 = vunpack.c.l.b16 %v222
    %v255 = vunpack.c.l.b16 %v223
    %v256 = vunpack.c.l.b16 %v224
    %v257 = vunpack.c.l.b16 %v225
    %v258 = vunpack.c.l.b16 %v226
    %v259 = vunpack.c.l.b16 %v227
    %v260 = vunpack.c.l.b16 %v228
    %v261 = vpack.c.b16 %v246, %v245
    %v262 = vpack.c.b16 %v248, %v247
    %v263 = vpack.c.b16 %v250, %v249
    %v264 = vpack.c.b16 %v252, %v251
    %v265 = vpack.c.b16 %v254, %v253
    %v266 = vpack.c.b16 %v256, %v255
    %v267 = vpack.c.b16 %v258, %v257
    %v268 = vpack.c.b16 %v260, %v259
    %277 = vmatprep.subr.bf16.mxu0 0
    %278 = vmatpush1.bf16.msra.mxu0 %v261
    %279 = vmatprep.subr.bf16.mxu0 0
    %280 = vmatpush1.bf16.msra.mxu0 %v262
    %281 = vmatprep.subr.bf16.mxu0 0
    %282 = vmatpush1.bf16.msra.mxu0 %v263
    %283 = vmatprep.subr.bf16.mxu0 0
    %284 = vmatpush1.bf16.msra.mxu0 %v264
    %285 = vmatprep.subr.bf16.mxu0 0
    %286 = vmatpush1.bf16.msra.mxu0 %v265
    %287 = vmatprep.subr.bf16.mxu0 0
    %288 = vmatpush1.bf16.msra.mxu0 %v266
    %289 = vmatprep.subr.bf16.mxu0 0
    %290 = vmatpush1.bf16.msra.mxu0 %v267
    %291 = vmatprep.subr.bf16.mxu0 0
    %292 = vmatpush1.bf16.msra.mxu0 %v268
    %293 = vmatprep.subr.bf16.mxu0 0
    %294 = vmatpush1.bf16.msra.mxu0 0
    %295 = vmatprep.subr.bf16.mxu0 0
    %296 = vmatpush1.bf16.msra.mxu0 0
    %297 = vmatprep.subr.bf16.mxu0 0
    %298 = vmatpush1.bf16.msra.mxu0 0
    %299 = vmatprep.subr.bf16.mxu0 0
    %300 = vmatpush1.bf16.msra.mxu0 0
    %301 = vmatprep.subr.bf16.mxu0 0
    %302 = vmatpush1.bf16.msra.mxu0 0
    %303 = vmatprep.subr.bf16.mxu0 0
    %304 = vmatpush1.bf16.msra.mxu0 0
    %305 = vmatprep.subr.bf16.mxu0 0
    %306 = vmatpush1.bf16.msra.mxu0 0
    %307 = vmatprep.subr.bf16.mxu0 0
    %308 = vmatpush1.bf16.msra.mxu0 0
    %309 = vmatprep.mubr.bf16.mxu0 0
    %310 = vmatmul.mubr.bf16.gmra.mrb[0].mxu0 %v211
    %v311 = vpop.f32.mrb[0].mxu0
    %v312 = vadd.f32 0.0, %v311
    %v313 = vpop.f32.mrb[0].mxu0
    %v314 = vpop.f32.mrb[0].mxu0
    %v315 = vadd.f32 0.0, %v314
    %v316 = vpop.f32.mrb[0].mxu0
    %317 = vdwg.mxu0
    %v318 = vpack.c.bf16 %v315, %v312
    %s319 = scalar_lea.vmem %s3, 1
    %v320 = vld [vmem:[%s319] sm:$0x1]
    %v322 = vlaneseq
    %v323 = vshrl.u32 %v322, 7
    %v324 = vsub.s32 0, %v323
    %v325 = vrot.slane %v320, %v324
    %327 = vmatprep.subr.bf16.mxu0 0
    %328 = vmatpush1.bf16.msra.mxu0 %v318
    %329 = vmatprep.subr.bf16.mxu0 0
    %330 = vmatpush1.bf16.msra.mxu0 0
    %331 = vmatprep.subr.bf16.mxu0 0
    %332 = vmatpush1.bf16.msra.mxu0 0
    %333 = vmatprep.subr.bf16.mxu0 0
    %334 = vmatpush1.bf16.msra.mxu0 0
    %335 = vmatprep.subr.bf16.mxu0 0
    %336 = vmatpush1.bf16.msra.mxu0 0
    %337 = vmatprep.subr.bf16.mxu0 0
    %338 = vmatpush1.bf16.msra.mxu0 0
    %339 = vmatprep.subr.bf16.mxu0 0
    %340 = vmatpush1.bf16.msra.mxu0 0
    %341 = vmatprep.subr.bf16.mxu0 0
    %342 = vmatpush1.bf16.msra.mxu0 0
    %343 = vmatprep.subr.bf16.mxu0 0
    %344 = vmatpush1.bf16.msra.mxu0 0
    %345 = vmatprep.subr.bf16.mxu0 0
    %346 = vmatpush1.bf16.msra.mxu0 0
    %347 = vmatprep.subr.bf16.mxu0 0
    %348 = vmatpush1.bf16.msra.mxu0 0
    %349 = vmatprep.subr.bf16.mxu0 0
    %350 = vmatpush1.bf16.msra.mxu0 0
    %351 = vmatprep.subr.bf16.mxu0 0
    %352 = vmatpush1.bf16.msra.mxu0 0
    %353 = vmatprep.subr.bf16.mxu0 0
    %354 = vmatpush1.bf16.msra.mxu0 0
    %355 = vmatprep.subr.bf16.mxu0 0
    %356 = vmatpush1.bf16.msra.mxu0 0
    %357 = vmatprep.subr.bf16.mxu0 0
    %358 = vmatpush1.bf16.msra.mxu0 0
    %359 = vmatprep.mubr.bf16.mxu0 0
    %360 = vmatmul.mubr.bf16.gmra.mrb[0].mxu0 %v166
    %v361 = vpop.f32.mrb[0].mxu0
    %v362 = vadd.f32 %v325, %v361
    %v363 = vpop.f32.mrb[0].mxu0
    %v364 = vpop.f32.mrb[0].mxu0
    %v365 = vadd.f32 %v325, %v364
    %v366 = vpop.f32.mrb[0].mxu0
    %367 = vdwg.mxu0
    %v368 = vtanh.pop %v362
    %v369 = vtanh.pop %v365
    %370 = vst [vmem:[#allocation5] sm:$0xff] %v368
    %371 = vst [vmem:[#allocation5 + $0x8] sm:$0xff] %v369
    %v372 = vpack.c.bf16 %v369, %v368
    %v373 = vld [vmem:[%s4] sm:$0xf]
    %v374 = vld [vmem:[%s4 + $0x4] sm:$0xf]
    %v375 = vld [vmem:[%s4 + $0x8] sm:$0xf]
    %v376 = vld [vmem:[%s4 + $0xc] sm:$0xf]
    %v377 = vld [vmem:[%s4 + $0x10] sm:$0xf]
    %v378 = vld [vmem:[%s4 + $0x14] sm:$0xf]
    %v379 = vld [vmem:[%s4 + $0x18] sm:$0xf]
    %v380 = vld [vmem:[%s4 + $0x1c] sm:$0xf]
    %v381 = vld [vmem:[%s4 + $0x20] sm:$0xf]
    %v382 = vld [vmem:[%s4 + $0x24] sm:$0xf]
    %v383 = vld [vmem:[%s4 + $0x28] sm:$0xf]
    %v384 = vld [vmem:[%s4 + $0x2c] sm:$0xf]
    %v385 = vld [vmem:[%s4 + $0x30] sm:$0xf]
    %v386 = vld [vmem:[%s4 + $0x34] sm:$0xf]
    %v387 = vld [vmem:[%s4 + $0x38] sm:$0xf]
    %v388 = vld [vmem:[%s4 + $0x3c] sm:$0xf]
    %v389 = vld [vmem:[%s5] sm:$0x1]
    %v391 = vlaneseq
    %v392 = vshrl.u32 %v391, 7
    %v393 = vsub.s32 0, %v392
    %v394 = vrot.slane %v389, %v393
    %v412 = vunpack.c.l.b16 %v373
    %v413 = vunpack.c.l.b16 %v374
    %v414 = vunpack.c.l.b16 %v375
    %v415 = vunpack.c.l.b16 %v376
    %v416 = vunpack.c.l.b16 %v377
    %v417 = vunpack.c.l.b16 %v378
    %v418 = vunpack.c.l.b16 %v379
    %v419 = vunpack.c.l.b16 %v380
    %v420 = vunpack.c.l.b16 %v381
    %v421 = vunpack.c.l.b16 %v382
    %v422 = vunpack.c.l.b16 %v383
    %v423 = vunpack.c.l.b16 %v384
    %v424 = vunpack.c.l.b16 %v385
    %v425 = vunpack.c.l.b16 %v386
    %v426 = vunpack.c.l.b16 %v387
    %v427 = vunpack.c.l.b16 %v388
    %v428 = vpack.c.b16 %v413, %v412
    %v429 = vpack.c.b16 %v415, %v414
    %v430 = vpack.c.b16 %v417, %v416
    %v431 = vpack.c.b16 %v419, %v418
    %v432 = vpack.c.b16 %v421, %v420
    %v433 = vpack.c.b16 %v423, %v422
    %v434 = vpack.c.b16 %v425, %v424
    %v435 = vpack.c.b16 %v427, %v426
    %444 = vmatprep.subr.bf16.mxu0 0
    %445 = vmatpush1.bf16.msra.mxu0 %v428
    %446 = vmatprep.subr.bf16.mxu0 0
    %447 = vmatpush1.bf16.msra.mxu0 %v429
    %448 = vmatprep.subr.bf16.mxu0 0
    %449 = vmatpush1.bf16.msra.mxu0 %v430
    %450 = vmatprep.subr.bf16.mxu0 0
    %451 = vmatpush1.bf16.msra.mxu0 %v431
    %452 = vmatprep.subr.bf16.mxu0 0
    %453 = vmatpush1.bf16.msra.mxu0 %v432
    %454 = vmatprep.subr.bf16.mxu0 0
    %455 = vmatpush1.bf16.msra.mxu0 %v433
    %456 = vmatprep.subr.bf16.mxu0 0
    %457 = vmatpush1.bf16.msra.mxu0 %v434
    %458 = vmatprep.subr.bf16.mxu0 0
    %459 = vmatpush1.bf16.msra.mxu0 %v435
    %460 = vmatprep.subr.bf16.mxu0 0
    %461 = vmatpush1.bf16.msra.mxu0 0
    %462 = vmatprep.subr.bf16.mxu0 0
    %463 = vmatpush1.bf16.msra.mxu0 0
    %464 = vmatprep.subr.bf16.mxu0 0
    %465 = vmatpush1.bf16.msra.mxu0 0
    %466 = vmatprep.subr.bf16.mxu0 0
    %467 = vmatpush1.bf16.msra.mxu0 0
    %468 = vmatprep.subr.bf16.mxu0 0
    %469 = vmatpush1.bf16.msra.mxu0 0
    %470 = vmatprep.subr.bf16.mxu0 0
    %471 = vmatpush1.bf16.msra.mxu0 0
    %472 = vmatprep.subr.bf16.mxu0 0
    %473 = vmatpush1.bf16.msra.mxu0 0
    %474 = vmatprep.subr.bf16.mxu0 0
    %475 = vmatpush1.bf16.msra.mxu0 0
    %476 = vmatprep.mubr.bf16.mxu0 0
    %477 = vmatmul.mubr.bf16.gmra.mrb[0].mxu0 %v372
    %v478 = vpop.f32.mrb[0].mxu0
    %v479 = vadd.f32 %v394, %v478
    %v480 = vpop.f32.mrb[0].mxu0
    %v481 = vpop.f32.mrb[0].mxu0
    %v482 = vadd.f32 %v394, %v481
    %v483 = vpop.f32.mrb[0].mxu0
    %484 = vdwg.mxu0
    %485 = vmax.xlane.f32.xlu0 %v479
    %v486 = vpop.xlane.xlu0 %485
    %487 = vmax.xlane.f32.xlu0 %v482
    %v488 = vpop.xlane.xlu0 %487
    %v489 = vsub.f32 %v479, %v486
    %v490 = vsub.f32 %v482, %v488
    %v491 = vmul.f32 %v489, 1.442695
    %v492 = vpow.pop %v491
    %v493 = vmul.f32 %v490, 1.442695
    %v494 = vpow.pop %v493
    %495 = vadd.xlane.f32.xlu0 %v492
    %v496 = vpop.xlane.xlu0 %495
    %497 = vadd.xlane.f32.xlu0 %v494
    %v498 = vpop.xlane.xlu0 %497
    %v499 = vlog2.pop %v496
    %v500 = vmul.f32 %v499, 0.6931472
    %v501 = vlog2.pop %v498
    %v502 = vmul.f32 %v501, 0.6931472
    %v503 = vsub.f32 %v489, %v500
    %v504 = vsub.f32 %v490, %v502
    %505 = vst [vmem:[%s6] sm:$0xff] %v503
    %506 = vst [vmem:[%s6 + $0x8] sm:$0xff] %v504
    // Predicated region
    $region30: #{gcn_forward.1} parent=1 // pred_check
      _
    $region31: #{gcn_forward.1} parent=1 // pred_check_branch
      %508 = sbr.rel (0) target = $region33
    $region32: #{gcn_forward.1} parent=1 // pred_region
      _
    $region33: #{gcn_forward.1} parent=1 // pred_fallthru
      _
    // Predicated region
    $region34: #{gcn_forward.1} parent=1 // pred_check
      _
    $region35: #{gcn_forward.1} parent=1 // pred_check_branch
      %510 = sbr.rel (0) target = $region37
    $region36: #{gcn_forward.1} parent=1 // pred_region
      %s512 = ssub.s32 256, 256
      %513 = vsyncadd [#allocation4], %s512
      %s514 = sshll.u32 [#allocation5], 4
      %s515 = int_to_ptr.vmem [resolvable:$true] %s514
      %520 = dma.vmem_to_hbm [thread:$0]  %s515, 256, %s7, [#allocation4], 128, 128, 8
    $region37: #{gcn_forward.1} parent=1 // pred_fallthru
      _
    // Predicated region
    $region38: #{gcn_forward.1} parent=1 // pred_check
      _
    $region39: #{gcn_forward.1} parent=1 // pred_check_branch
      %522 = sbr.rel (0) target = $region41
    $region40: #{gcn_forward.1} parent=1 // pred_region
      _
    $region41: #{gcn_forward.1} parent=1 // pred_fallthru
      _
    // Predicated region
    $region42: #{gcn_forward.1} parent=1 // pred_check
      _
    $region43: #{gcn_forward.1} parent=1 // pred_check_branch
      %524 = sbr.rel (0) target = $region45
    $region44: #{gcn_forward.1} parent=1 // pred_region
      %525 = dma.done [#allocation4], 256
    $region45: #{gcn_forward.1} parent=1 // pred_fallthru
      _
    %526 = vsyncpa [#allocation3], 1
    %527 = vsyncpa [#allocation4], 1

</llo_original>
